<compile_context>
chip_gen: v7x
topology: tpu7x:2x2x1
jax: 0.10.0
libtpu: 0.0.40
codegen_flags: <defaults>
</compile_context>

<pallas_src>
import jax
import jax.numpy as jnp
from jax.experimental import pallas as pl
from jax.experimental.pallas import tpu as pltpu


def _linear_vpu_kernel(x_ref, w_ref, b_ref, o_ref):
    # x_ref: [TB, F] (VMEM), w_ref: [1, F] (VMEM, broadcast over rows),
    # b_ref: [1, 1]  (SMEM scalar), o_ref: [TB, 1] (VMEM)
    x = x_ref[...]
    w = w_ref[...]
    # VPU elementwise multiply + XLU lane reduction; no MXU for OUT=1.
    acc = jnp.sum(x * w, axis=-1, keepdims=True)          # [TB, 1] f32
    o_ref[...] = (acc + b_ref[0, 0]).astype(o_ref.dtype)


def linear_forward(x, weight, bias, *, block_rows=2048):
    """nn.Linear(13, 1): x [B, F] -> x @ weight.T + bias, output [B, 1]."""
    B, F = x.shape
    OUT, Fw = weight.shape
    assert Fw == F and OUT == 1
    w_row = weight.astype(jnp.float32)            # [1, F] -- no transpose needed
    bias2d = bias.reshape(1, 1).astype(jnp.float32)

    if B <= block_rows:
        # Small batch: single invocation, no grid, full-extent blocks.
        return pl.pallas_call(
            _linear_vpu_kernel,
            out_shape=jax.ShapeDtypeStruct((B, OUT), x.dtype),
            in_specs=[
                pl.BlockSpec(memory_space=pltpu.MemorySpace.VMEM),   # x
                pl.BlockSpec(memory_space=pltpu.MemorySpace.VMEM),   # weight row
                pl.BlockSpec(memory_space=pltpu.MemorySpace.SMEM),   # bias scalar
            ],
            out_specs=pl.BlockSpec(memory_space=pltpu.MemorySpace.VMEM),
        )(x, w_row, bias2d)

    # Large batch: tile rows; "parallel" axis lets megacore / v7x dual TCs
    # split the row tiles. Pad B up to a multiple of the tile, slice after.
    tb = block_rows
    n_tiles = pl.cdiv(B, tb)
    pad = n_tiles * tb - B
    x_p = jnp.pad(x, ((0, pad), (0, 0))) if pad else x

    out_p = pl.pallas_call(
        _linear_vpu_kernel,
        out_shape=jax.ShapeDtypeStruct((n_tiles * tb, OUT), x.dtype),
        grid_spec=pl.GridSpec(
            grid=(n_tiles,),
            in_specs=[
                pl.BlockSpec((tb, F), lambda i: (i, 0)),             # x row tile
                pl.BlockSpec((1, F), lambda i: (0, 0)),              # weight row
                pl.BlockSpec(memory_space=pltpu.MemorySpace.SMEM),   # bias scalar
            ],
            out_specs=pl.BlockSpec((tb, OUT), lambda i: (i, 0)),
        ),
        compiler_params=pltpu.CompilerParams(
            dimension_semantics=("parallel",),
        ),
    )(x_p, w_row, bias2d)
    return out_p[:B]


if __name__ == "__main__":
    key = jax.random.PRNGKey(0)
    k_x, k_w, k_b, k_x2 = jax.random.split(key, 4)

    F, OUT = 13, 1  # nn.Linear(13, 1)

    # Deterministic PyTorch-style init: U(-1/sqrt(fan_in), 1/sqrt(fan_in))
    bound = 1.0 / (F ** 0.5)
    weight = jax.random.uniform(k_w, (OUT, F), jnp.float32, -bound, bound)
    bias = jax.random.uniform(k_b, (OUT,), jnp.float32, -bound, bound)

    fwd = jax.jit(linear_forward)

    # Small (module-spec) batch: exercises the grid-less path.
    B = 8
    x = jax.random.normal(k_x, (B, F), jnp.float32)
    out = jax.block_until_ready(fwd(x, weight, bias))
    ref = x @ weight.T + bias[None, :]
    assert out.shape == (B, OUT)
    assert jnp.allclose(out, ref, atol=1e-5, rtol=1e-5)

    # Larger batch: exercises the tiled "parallel" path (with row padding).
    B2 = 4096 + 5
    x2 = jax.random.normal(k_x2, (B2, F), jnp.float32)
    out2 = jax.block_until_ready(fwd(x2, weight, bias))
    ref2 = x2 @ weight.T + bias[None, :]
    assert out2.shape == (B2, OUT)
    assert jnp.allclose(out2, ref2, atol=1e-5, rtol=1e-5)

    print("KERNEL_OK")
</pallas_src>

<mosaic_0001>
module attributes {stable_mosaic.version = 11 : i64} {
  func.func @_linear_vpu_kernel(%arg0: memref<8x13xf32, #tpu.memory_space<vmem>>, %arg1: memref<1x13xf32, #tpu.memory_space<vmem>>, %arg2: memref<1x1xf32, #tpu.memory_space<smem>>, %arg3: memref<8x1xf32, #tpu.memory_space<vmem>>) attributes {dimension_semantics = [], scalar_prefetch = 0 : i64, scratch_operands = 0 : i64, tpu.core_type = #tpu.core_type<tc>} {
    %c0 = arith.constant 0 : index
    %c0_0 = arith.constant 0 : index
    %0 = vector.load %arg0[%c0, %c0_0] : memref<8x13xf32, #tpu.memory_space<vmem>>, vector<8x13xf32>
    %c0_1 = arith.constant 0 : index
    %c0_2 = arith.constant 0 : index
    %1 = vector.load %arg1[%c0_1, %c0_2] : memref<1x13xf32, #tpu.memory_space<vmem>>, vector<1x13xf32>
    %2 = vector.broadcast %1 : vector<1x13xf32> to vector<8x13xf32>
    %3 = arith.mulf %0, %2 : vector<8x13xf32>
    %cst = arith.constant dense<0.000000e+00> : vector<8xf32>
    %4 = vector.multi_reduction <add>, %3, %cst [1] : vector<8x13xf32> to vector<8xf32>
    %5 = vector.shape_cast %4 : vector<8xf32> to vector<8x1xf32>
    %c0_3 = arith.constant 0 : index
    %c0_4 = arith.constant 0 : index
    %6 = memref.load %arg2[%c0_3, %c0_4] : memref<1x1xf32, #tpu.memory_space<smem>>
    %7 = vector.broadcast %6 : f32 to vector<8x1xf32>
    %8 = arith.addf %5, %7 : vector<8x1xf32>
    %c0_5 = arith.constant 0 : index
    %c0_6 = arith.constant 0 : index
    %9 = vector.load %arg3[%c0_5, %c0_6] : memref<8x1xf32, #tpu.memory_space<vmem>>, vector<8x1xf32>
    tpu.vector_store %arg3[%c0_5, %c0_6], %8 {strides = array<i32>} : memref<8x1xf32, #tpu.memory_space<vmem>>, vector<8x1xf32>,
    return
  }
}

</mosaic_0001>

<llo_original>
// kernel: linear_forward.1
$region0: #{linear_forward.1}
  #allocation0 [shape = 'u32[]', space=smem, size = 0x4, offset = 0x4, fixed_abs, tag = 'smem constant byte address 0x4 - core index']
  #allocation1 [shape = 'u32[144,128]{1,0:T(1,128)}', space=vmem, size = 0x12000, scoped, tag = 'internal scratch']
  #allocation2 [shape = 'f32[1,1]{1,0:T(1,128)S(6)}', space=smem, size = 0x200, scoped, tag = 'scoped memory for linear_forward.1']
  %s0 = inlined_call_operand.hbm [shape: f32[8,13], index: 0, kind: input, shape index: {}]
  %s1 = inlined_call_operand.vmem [shape: f32[1,13], index: 1, kind: input, shape index: {}]
  %s2 = inlined_call_operand.<no memory space> [shape: f32[1,1], index: 2, kind: input, shape index: {}]
  %s3 = inlined_call_operand.vmem [shape: f32[8,1], index: 3, kind: output, shape index: {}]
  %s4 = sld [smem:[#allocation0]]
  $region26: #{linear_forward.1} parent=0
    _
  %s6 = ssub.s32 1, %s4
  %s7 = scalar_select 0, %s6, %s4
  %8 = sst [smem:[#allocation2]] %s2
  $region1: #{linear_forward.1} parent=0
    #allocation3 [shape = 'u8[4096]{0}', space=vmem, size = 0x1000, scoped, tag = 'input window, operand 0, single buffered']
    #allocation4 [shape = 's32[1]{0}', space=sflag, size = 0x4, scoped, tag = 'scoped memory for linear_forward.1']
    %9 = vsyncpa [#allocation4], 0
    // Predicated region
    $region2: #{linear_forward.1} parent=1 // pred_check
      _
    $region3: #{linear_forward.1} parent=1 // pred_check_branch
      %11 = sbr.rel (0) target = $region5
    $region4: #{linear_forward.1} parent=1 // pred_region
      %s13 = ssub.s32 128, 128
      %14 = vsyncadd [#allocation4], %s13
      %s16 = sshll.u32 [#allocation3], 4
      %s17 = int_to_ptr.vmem [resolvable:$true] %s16
      %19 = dma.hbm_to_vmem [thread:$0]  %s0, 128, %s17, [#allocation4]
    $region5: #{linear_forward.1} parent=1 // pred_fallthru
      _
    // Predicated region
    $region6: #{linear_forward.1} parent=1 // pred_check
      _
    $region7: #{linear_forward.1} parent=1 // pred_check_branch
      %21 = sbr.rel (0) target = $region9
    $region8: #{linear_forward.1} parent=1 // pred_region
      _
    $region9: #{linear_forward.1} parent=1 // pred_fallthru
      _
    // Predicated region
    $region10: #{linear_forward.1} parent=1 // pred_check
      _
    $region11: #{linear_forward.1} parent=1 // pred_check_branch
      %23 = sbr.rel (0) target = $region13
    $region12: #{linear_forward.1} parent=1 // pred_region
      _
    $region13: #{linear_forward.1} parent=1 // pred_fallthru
      _
    // Predicated region
    $region14: #{linear_forward.1} parent=1 // pred_check
      _
    $region15: #{linear_forward.1} parent=1 // pred_check_branch
      %25 = sbr.rel (0) target = $region17
    $region16: #{linear_forward.1} parent=1 // pred_region
      %26 = dma.done [#allocation4], 128
    $region17: #{linear_forward.1} parent=1 // pred_fallthru
      _
    %v27 = vld [vmem:[#allocation3] sm:$0xff]
    %v28 = vld [vmem:[%s1] sm:$0x1]
    %v30 = vlaneseq
    %v31 = vshrl.u32 %v30, 7
    %v32 = vsub.s32 0, %v31
    %v33 = vrot.slane %v28, %v32
    %v35 = vmul.f32 %v27, %v33
    %vm36 = vcmask 105472
    %v37 = vsel %vm36, %v35, 0.0
    %38 = vadd.xlane.f32.xlu0 %v37
    %v39 = vpop.xlane.xlu0 %38
    %s40 = sld [smem:[#allocation2]]
    %v41 = vstv %s40
    %v42 = vadd.f32 %v39, %v41
    %vm43 = vcmask 7168
    %44 = vst.msk [vmem:[%s3] sm:$0xff] %vm43, %v42
    // Predicated region
    $region18: #{linear_forward.1} parent=1 // pred_check
      _
    $region19: #{linear_forward.1} parent=1 // pred_check_branch
      %46 = sbr.rel (0) target = $region21
    $region20: #{linear_forward.1} parent=1 // pred_region
      _
    $region21: #{linear_forward.1} parent=1 // pred_fallthru
      _
    // Predicated region
    $region22: #{linear_forward.1} parent=1 // pred_check
      _
    $region23: #{linear_forward.1} parent=1 // pred_check_branch
      %48 = sbr.rel (0) target = $region25
    $region24: #{linear_forward.1} parent=1 // pred_region
      _
    $region25: #{linear_forward.1} parent=1 // pred_fallthru
      _
    %49 = vsyncpa [#allocation4], 1

</llo_original>
